<compile_context>
chip_gen: v5e
topology: v5e:2x2
jax: 0.10.0
libtpu: 0.0.40
codegen_flags: <defaults>
</compile_context>

<pallas_src>
import jax
import jax.numpy as jnp
from jax import lax
from jax.experimental import pallas as pl
from jax.experimental.pallas import tpu as pltpu


def _round_up(x: int, m: int) -> int:
    return ((x + m - 1) // m) * m


def _close_layer_kernel_single_k(x_ref, w_ref, o_ref):
    # x_ref: (tm, K)  w_ref: (tn, K)  o_ref: (tm, tn)
    # y_tile = x_tile @ w_tile.T on the MXU; no K reduction across grid steps,
    # so write the result directly (no scratch accumulator needed).
    o_ref[...] = lax.dot_general(
        x_ref[...],
        w_ref[...],
        dimension_numbers=(((1,), (1,)), ((), ())),
        preferred_element_type=jnp.float32,
    ).astype(o_ref.dtype)


def _close_layer_kernel_ksplit(x_ref, w_ref, o_ref, acc_ref):
    # x_ref:   (tm, tk)  activation tile
    # w_ref:   (tn, tk)  weight tile in PyTorch (out, in) layout
    # o_ref:   (tm, tn)  output tile
    # acc_ref: (tm, tn)  f32 accumulator, persists across the K grid axis
    @pl.when(pl.program_id(2) == 0)
    def _():
        acc_ref[...] = jnp.zeros_like(acc_ref)

    acc_ref[...] += lax.dot_general(
        x_ref[...],
        w_ref[...],
        dimension_numbers=(((1,), (1,)), ((), ())),
        preferred_element_type=jnp.float32,
    )

    @pl.when(pl.program_id(2) == pl.num_programs(2) - 1)
    def _():
        o_ref[...] = acc_ref[...].astype(o_ref.dtype)


def close_layer(x, weight, *, tm=256, tn=256, tk=512):
    """Forward of CloseLayer: y = x @ weight.T  (no bias).

    x:      (batch, width)
    weight: (output_size, width)   -- PyTorch nn.Linear convention (untouched)
    returns (batch, output_size)
    """
    batch, width = x.shape
    output_size, w_width = weight.shape
    assert width == w_width, "weight in_features must match x width"

    # Clamp tiles for small problems while keeping TPU-friendly alignment:
    # sublane dim multiple of 8, lane dim multiple of 128 (lane-dense stores).
    tm = min(tm, _round_up(batch, 8))
    tn = min(tn, _round_up(output_size, 128))
    tk = min(tk, _round_up(width, 128))

    M = _round_up(batch, tm)
    N = _round_up(output_size, tn)
    K = _round_up(width, tk)

    # Zero-pad to tile multiples (K-padding contributes zeros to the dot;
    # M/N padding is sliced away below). No-op when shapes already divide.
    if (M, K) != (batch, width):
        x = jnp.pad(x, ((0, M - batch), (0, K - width)))
    if (N, K) != (output_size, width):
        weight = jnp.pad(weight, ((0, N - output_size), (0, K - width)))

    itemsize = jnp.dtype(x.dtype).itemsize
    cost = pl.CostEstimate(
        flops=2 * M * N * K,
        transcendentals=0,
        bytes_accessed=(M * K + N * K + M * N) * itemsize,
    )

    k_steps = K // tk
    if k_steps == 1:
        # Fast path: whole K in one tile -> no accumulator, 2-D grid.
        grid_spec = pltpu.PrefetchScalarGridSpec(
            num_scalar_prefetch=0,
            grid=(M // tm, N // tn),
            in_specs=[
                pl.BlockSpec((tm, K), lambda i, j: (i, 0)),   # x tile
                pl.BlockSpec((tn, K), lambda i, j: (j, 0)),   # weight tile (out, in)
            ],
            out_specs=pl.BlockSpec((tm, tn), lambda i, j: (i, j)),
        )
        y = pl.pallas_call(
            _close_layer_kernel_single_k,
            out_shape=jax.ShapeDtypeStruct((M, N), x.dtype),
            grid_spec=grid_spec,
            compiler_params=pltpu.CompilerParams(
                dimension_semantics=("parallel", "parallel"),
            ),
            cost_estimate=cost,
        )(x, weight)
    else:
        grid_spec = pltpu.PrefetchScalarGridSpec(
            num_scalar_prefetch=0,
            grid=(M // tm, N // tn, k_steps),
            in_specs=[
                pl.BlockSpec((tm, tk), lambda i, j, k: (i, k)),   # x tile
                pl.BlockSpec((tn, tk), lambda i, j, k: (j, k)),   # weight tile (out, in)
            ],
            out_specs=pl.BlockSpec((tm, tn), lambda i, j, k: (i, j)),
            scratch_shapes=[pltpu.VMEM((tm, tn), jnp.float32)],
        )
        y = pl.pallas_call(
            _close_layer_kernel_ksplit,
            out_shape=jax.ShapeDtypeStruct((M, N), x.dtype),
            grid_spec=grid_spec,
            compiler_params=pltpu.CompilerParams(
                dimension_semantics=("parallel", "parallel", "arbitrary"),
            ),
            cost_estimate=cost,
        )(x, weight)

    if (M, N) != (batch, output_size):
        y = y[:batch, :output_size]
    return y


if __name__ == "__main__":
    key = jax.random.PRNGKey(0)

    # --- Literal module shapes: width=32, output_size=16, batch=8 ------------
    batch, width, output_size = 8, 32, 16
    kx, kw, key = jax.random.split(key, 3)
    x = jax.random.normal(kx, (batch, width), dtype=jnp.float32)
    bound = 1.0 / jnp.sqrt(width)
    weight = jax.random.uniform(
        kw, (output_size, width), dtype=jnp.float32, minval=-bound, maxval=bound
    )

    y = jax.block_until_ready(close_layer(x, weight))
    y_ref = x @ weight.T
    assert y.shape == (batch, output_size)
    assert jnp.allclose(y, y_ref, atol=1e-5, rtol=1e-5)

    # --- Larger shape to exercise the K-split grid (M/N padding + reduction) -
    b2, w2, o2 = 256, 1024, 384
    kx2, kw2 = jax.random.split(key)
    x2 = jax.random.normal(kx2, (b2, w2), dtype=jnp.float32)
    wt2 = jax.random.normal(kw2, (o2, w2), dtype=jnp.float32) * (1.0 / jnp.sqrt(w2))

    y2 = jax.block_until_ready(close_layer(x2, wt2, tk=512))
    y2_ref = x2 @ wt2.T
    assert y2.shape == (b2, o2)
    assert jnp.allclose(y2, y2_ref, atol=1e-2, rtol=1e-2)

    print("KERNEL_OK")
</pallas_src>

<mosaic_0001>
module attributes {stable_mosaic.version = 11 : i64} {
  func.func @_close_layer_kernel_single_k(%arg0: i32, %arg1: i32, %arg2: memref<8x128xf32, #tpu.memory_space<vmem>>, %arg3: memref<128x128xf32, #tpu.memory_space<vmem>>, %arg4: memref<8x128xf32, #tpu.memory_space<vmem>>) attributes {dimension_semantics = [#tpu.dimension_semantics<parallel>, #tpu.dimension_semantics<parallel>], iteration_bounds = array<i64: 1, 1>, scalar_prefetch = 0 : i64, scratch_operands = 0 : i64, tpu.core_type = #tpu.core_type<tc>, window_params = [{transform_indices = @transform_0, window_bounds = array<i64: 8, 128>}, {transform_indices = @transform_1, window_bounds = array<i64: 128, 128>}, {transform_indices = @transform_2, window_bounds = array<i64: 8, 128>}]} {
    %c0 = arith.constant 0 : index
    %c0_0 = arith.constant 0 : index
    %0 = vector.load %arg2[%c0, %c0_0] : memref<8x128xf32, #tpu.memory_space<vmem>>, vector<8x128xf32>
    %c0_1 = arith.constant 0 : index
    %c0_2 = arith.constant 0 : index
    %1 = vector.load %arg3[%c0_1, %c0_2] : memref<128x128xf32, #tpu.memory_space<vmem>>, vector<128x128xf32>
    %cst = arith.constant dense<0.000000e+00> : vector<8x128xf32>
    %2 = tpu.matmul %0, %1, %cst {dimension_numbers = #tpu.dot_dimension_numbers<[1], [1], [0], [0], [0, 0, 1, 0], [], []>} : vector<8x128xf32>, vector<128x128xf32>, vector<8x128xf32> -> vector<8x128xf32>
    %c0_3 = arith.constant 0 : index
    %c0_4 = arith.constant 0 : index
    %3 = vector.load %arg4[%c0_3, %c0_4] : memref<8x128xf32, #tpu.memory_space<vmem>>, vector<8x128xf32>
    tpu.vector_store %arg4[%c0_3, %c0_4], %2 {strides = array<i32>} : memref<8x128xf32, #tpu.memory_space<vmem>>, vector<8x128xf32>,
    return
  }
  func.func @transform_0(%arg0: i32, %arg1: i32) -> (i32, i32) {
    %c0_i32 = arith.constant 0 : i32
    %c0_i32_0 = arith.constant 0 : i32
    return %arg0, %c0_i32 : i32, i32
  }
  func.func @transform_1(%arg0: i32, %arg1: i32) -> (i32, i32) {
    %c0_i32 = arith.constant 0 : i32
    %c0_i32_0 = arith.constant 0 : i32
    return %arg1, %c0_i32 : i32, i32
  }
  func.func @transform_2(%arg0: i32, %arg1: i32) -> (i32, i32) {
    %c0_i32 = arith.constant 0 : i32
    return %arg0, %arg1 : i32, i32
  }
}

</mosaic_0001>

<llo_original>
// kernel: tpu_custom_call.1
$region0: #{tpu_custom_call.1}
  #allocation0 [shape = 'u32[]', space=smem, size = 0x4, offset = 0x4, fixed_abs, tag = 'smem constant byte address 0x4 - core index']
  #allocation1 [shape = 'u32[72,128]{1,0:T(1,128)}', space=vmem, size = 0x9000, scoped, tag = 'internal scratch']
  %s0 = inlined_call_operand.hbm [shape: f32[8,128], index: 0, kind: input, shape index: {}]
  %s1 = inlined_call_operand.hbm [shape: f32[128,128], index: 1, kind: input, shape index: {}]
  %s2 = inlined_call_operand.hbm [shape: f32[8,128], index: 2, kind: output, shape index: {}]
  %s3 = sld [smem:[#allocation0]]
  $region26: #{tpu_custom_call.1} parent=0
    _
  %s5 = ssub.s32 1, %s3
  %s6 = scalar_select 0, %s5, %s3
  $region1: #{tpu_custom_call.1} parent=0
    #allocation2 [shape = 'u8[4096]{0}', space=vmem, size = 0x1000, scoped, tag = 'input window, operand 0, single buffered']
    #allocation3 [shape = 's32[1]{0}', space=sflag, size = 0x4, scoped, tag = 'scoped memory for tpu_custom_call.1']
    #allocation4 [shape = 's32[1]{0}', space=sflag, size = 0x4, scoped, tag = 'scoped memory for tpu_custom_call.1']
    #allocation5 [shape = 'u8[65536]{0}', space=vmem, size = 0x10000, scoped, tag = 'input window, operand 1, single buffered']
    #allocation6 [shape = 's32[1]{0}', space=sflag, size = 0x4, scoped, tag = 'scoped memory for tpu_custom_call.1']
    #allocation7 [shape = 'u8[4096]{0}', space=vmem, size = 0x1000, scoped, tag = 'output window, operand 0, single buffered']
    %7 = vsyncpa [#allocation3], 0
    %8 = vsyncpa [#allocation6], 0
    %9 = vsyncpa [#allocation4], 0
    // Predicated region
    $region2: #{tpu_custom_call.1} parent=1 // pred_check
      _
    $region3: #{tpu_custom_call.1} parent=1 // pred_check_branch
      %11 = sbr.rel (0) target = $region5
    $region4: #{tpu_custom_call.1} parent=1 // pred_region
      %13 = vsyncadd [#allocation3], 0
      %s15 = sshll.u32 %s0, 4
      %s16 = int_to_ptr.hbm [resolvable:$true] %s15
      %s17 = sshll.u32 [#allocation2], 4
      %s18 = int_to_ptr.vmem [resolvable:$true] %s17
      %20 = dma.hbm_to_vmem [thread:$0]  %s16, 128, %s18, [#allocation3]
    $region5: #{tpu_custom_call.1} parent=1 // pred_fallthru
      _
    // Predicated region
    $region6: #{tpu_custom_call.1} parent=1 // pred_check
      _
    $region7: #{tpu_custom_call.1} parent=1 // pred_check_branch
      %22 = sbr.rel (0) target = $region9
    $region8: #{tpu_custom_call.1} parent=1 // pred_region
      %24 = vsyncadd [#allocation6], 0
      %s25 = sshll.u32 %s1, 4
      %s26 = int_to_ptr.hbm [resolvable:$true] %s25
      %s27 = sshll.u32 [#allocation5], 4
      %s28 = int_to_ptr.vmem [resolvable:$true] %s27
      %33 = dma.hbm_to_vmem [thread:$0]  %s26, 2048, %s28, [#allocation6], 128, 128, 8
    $region9: #{tpu_custom_call.1} parent=1 // pred_fallthru
      _
    // Predicated region
    $region10: #{tpu_custom_call.1} parent=1 // pred_check
      _
    $region11: #{tpu_custom_call.1} parent=1 // pred_check_branch
      %35 = sbr.rel (0) target = $region13
    $region12: #{tpu_custom_call.1} parent=1 // pred_region
      %37 = dma.done [#allocation3], 128
    $region13: #{tpu_custom_call.1} parent=1 // pred_fallthru
      _
    // Predicated region
    $region14: #{tpu_custom_call.1} parent=1 // pred_check
      _
    $region15: #{tpu_custom_call.1} parent=1 // pred_check_branch
      %39 = sbr.rel (0) target = $region17
    $region16: #{tpu_custom_call.1} parent=1 // pred_region
      %41 = dma.done [#allocation6], 2048
    $region17: #{tpu_custom_call.1} parent=1 // pred_fallthru
      _
    %v42 = vld [vmem:[#allocation2] sm:$0xff]
    %v43 = vld [vmem:[#allocation5] sm:$0xff]
    %v44 = vld [vmem:[#allocation5 + $0x8] sm:$0xff]
    %v45 = vld [vmem:[#allocation5 + $0x10] sm:$0xff]
    %v46 = vld [vmem:[#allocation5 + $0x18] sm:$0xff]
    %v47 = vld [vmem:[#allocation5 + $0x20] sm:$0xff]
    %v48 = vld [vmem:[#allocation5 + $0x28] sm:$0xff]
    %v49 = vld [vmem:[#allocation5 + $0x30] sm:$0xff]
    %v50 = vld [vmem:[#allocation5 + $0x38] sm:$0xff]
    %v51 = vld [vmem:[#allocation5 + $0x40] sm:$0xff]
    %v52 = vld [vmem:[#allocation5 + $0x48] sm:$0xff]
    %v53 = vld [vmem:[#allocation5 + $0x50] sm:$0xff]
    %v54 = vld [vmem:[#allocation5 + $0x58] sm:$0xff]
    %v55 = vld [vmem:[#allocation5 + $0x60] sm:$0xff]
    %v56 = vld [vmem:[#allocation5 + $0x68] sm:$0xff]
    %v57 = vld [vmem:[#allocation5 + $0x70] sm:$0xff]
    %v58 = vld [vmem:[#allocation5 + $0x78] sm:$0xff]
    %59 = vmatpush.xpose.msra.mxu0 %v58
    %60 = vmatpush.xpose.msra.mxu0 %v57
    %61 = vmatpush.xpose.msra.mxu0 %v56
    %62 = vmatpush.xpose.msra.mxu0 %v55
    %63 = vmatpush.xpose.msra.mxu0 %v54
    %64 = vmatpush.xpose.msra.mxu0 %v53
    %65 = vmatpush.xpose.msra.mxu0 %v52
    %66 = vmatpush.xpose.msra.mxu0 %v51
    %67 = vmatpush.xpose.msra.mxu0 %v50
    %68 = vmatpush.xpose.msra.mxu0 %v49
    %69 = vmatpush.xpose.msra.mxu0 %v48
    %70 = vmatpush.xpose.msra.mxu0 %v47
    %71 = vmatpush.xpose.msra.mxu0 %v46
    %72 = vmatpush.xpose.msra.mxu0 %v45
    %73 = vmatpush.xpose.msra.mxu0 %v44
    %74 = vmatpush.xpose.msra.mxu0 %v43
    %75 = vmatmul.f32.gmra.mxu0 %v42
    %v76 = vpop.f32.mrf.mxu0
    %v77 = vadd.f32 0.0, %v76
    %78 = vdwg.mxu0
    %79 = vst [vmem:[#allocation7] sm:$0xff] %v77
    // Predicated region
    $region18: #{tpu_custom_call.1} parent=1 // pred_check
      _
    $region19: #{tpu_custom_call.1} parent=1 // pred_check_branch
      %81 = sbr.rel (0) target = $region21
    $region20: #{tpu_custom_call.1} parent=1 // pred_region
      %83 = vsyncadd [#allocation4], 0
      %s85 = sshll.u32 [#allocation7], 4
      %s86 = int_to_ptr.vmem [resolvable:$true] %s85
      %s87 = sshll.u32 %s2, 4
      %s88 = int_to_ptr.hbm [resolvable:$true] %s87
      %90 = dma.vmem_to_hbm [thread:$0]  %s86, 128, %s88, [#allocation4]
    $region21: #{tpu_custom_call.1} parent=1 // pred_fallthru
      _
    // Predicated region
    $region22: #{tpu_custom_call.1} parent=1 // pred_check
      _
    $region23: #{tpu_custom_call.1} parent=1 // pred_check_branch
      %92 = sbr.rel (0) target = $region25
    $region24: #{tpu_custom_call.1} parent=1 // pred_region
      %94 = dma.done [#allocation4], 128
    $region25: #{tpu_custom_call.1} parent=1 // pred_fallthru
      _
    %95 = vsyncpa [#allocation3], 1
    %96 = vsyncpa [#allocation6], 1
    %97 = vsyncpa [#allocation4], 1

</llo_original>
